<compile_context>
chip_gen: v7x
topology: tpu7x:2x2x1
jax: 0.10.0
libtpu: 0.0.40
codegen_flags: <defaults>
</compile_context>

<pallas_src>
import functools
import numpy as np
import jax
import jax.numpy as jnp
from jax.experimental import pallas as pl
from jax.experimental.pallas import tpu as pltpu


# ---------------------------------------------------------------------------
# Host-side: pooling / bilinear interpolation matrices.
# ---------------------------------------------------------------------------
def pool_matrix(n: int) -> np.ndarray:
    """AvgPool2d(kernel_size=2) along one axis as a (n//2, n) matrix (floor mode)."""
    P = np.zeros((n // 2, n), np.float32)
    for p in range(n // 2):
        P[p, 2 * p] = 0.5
        P[p, 2 * p + 1] = 0.5
    return P


def bilinear_matrix(n_out: int, n_in: int) -> np.ndarray:
    """1-D bilinear interpolation (align_corners=True) as a (n_out, n_in) matrix."""
    A = np.zeros((n_out, n_in), np.float32)
    if n_out == 1 or n_in == 1:
        A[:, 0] = 1.0
        return A
    scale = (n_in - 1) / (n_out - 1)
    for i in range(n_out):
        src = i * scale
        i0 = min(int(np.floor(src)), n_in - 1)
        i1 = min(i0 + 1, n_in - 1)
        f = src - i0
        A[i, i0] += 1.0 - f
        A[i, i1] += f
    return A


# ---------------------------------------------------------------------------
# Kernels.
# ---------------------------------------------------------------------------
def _updown_kron_kernel(x_ref, k_ref, o_ref, *, alpha):
    """x_ref: (tb, H*W); k_ref: (H*W, H*W) = kron(Mh, Mw)^T; lane-dense in/out."""
    x_in = x_ref[...]                                              # input dtype
    up = jnp.dot(x_in.astype(k_ref.dtype), k_ref[...],
                 preferred_element_type=jnp.float32)               # (tb, HW) f32
    xf = x_in.astype(jnp.float32)
    high = xf - up
    o_ref[...] = jnp.where(high >= 0, high, alpha * high).astype(o_ref.dtype)


def _updown_sep_kernel(x_ref, mhT_ref, mwT_ref, o_ref, *, alpha, h, w):
    """Separable fallback for large H*W.  Lane-dense (tb, H*W) in/out blocks."""
    tb = x_ref.shape[0]
    x_in = x_ref[...]                                              # (tb, H*W)
    xm = x_in.astype(mwT_ref.dtype)
    # W-side: one flat MXU matmul over all tb*H rows.
    t = jnp.dot(xm.reshape(tb * h, w), mwT_ref[...],
                preferred_element_type=jnp.float32).reshape(tb, h, w)
    # H-side: second flat 2-D matmul over all tb*W rows (one minor-dim relayout each way).
    tT = jnp.swapaxes(t, 1, 2).reshape(tb * w, h)                  # (tb*W, H)
    u = jnp.dot(tT.astype(mhT_ref.dtype), mhT_ref[...],
                preferred_element_type=jnp.float32).reshape(tb, w, h)
    up = jnp.swapaxes(u, 1, 2).reshape(tb, h * w)                  # (tb, H*W)
    xf = x_in.astype(jnp.float32)
    high = xf - up
    o_ref[...] = jnp.where(high >= 0, high, alpha * high).astype(o_ref.dtype)


# ---------------------------------------------------------------------------
# Wrapper.
# ---------------------------------------------------------------------------
_TARGET_F32_BLOCK_BYTES = 4 * 1024 * 1024   # ~4 MiB of f32 working data per grid step
_MAX_K_BYTES = 8 * 1024 * 1024              # kron matrix budget (single-buffered)
_VMEM_LIMIT = 48 * 1024 * 1024              # safe on v5e/v6e (128 MiB) and v7x (64 MiB)


def _round_up(v: int, m: int) -> int:
    return ((v + m - 1) // m) * m


def _choose_tb(B: int, HW: int) -> int:
    tb = max(8, ((_TARGET_F32_BLOCK_BYTES // (HW * 4)) // 8) * 8)
    if B < 8:
        return B                           # block dim equals full array dim
    tb = min(tb, (B // 8) * 8)             # keep blocks a multiple of 8 and <= B
    if B >= 16:
        # Guarantee >= 2 grid steps so both v7x TensorCores get work.
        tb = min(tb, _round_up(pl.cdiv(B, 2), 8))
    return max(tb, 8)


def updownblock_forward(x_nchw: jax.Array, alpha: float = 0.25) -> jax.Array:
    N, C, H, W = x_nchw.shape
    assert H >= 2 and W >= 2, "Updownblock needs H, W >= 2"
    B, HW = N * C, H * W
    dtype = x_nchw.dtype
    itemsize = np.dtype(dtype).itemsize

    # MXU operand dtype: bf16 when the input is already bf16 (native MXU on all gens);
    # f32 otherwise so the residual high = x - up keeps f32 accuracy.
    if dtype == jnp.bfloat16:
        mat_dtype, mat_itemsize = jnp.bfloat16, 2
    else:
        mat_dtype, mat_itemsize = jnp.float32, 4

    Mh = bilinear_matrix(H, H // 2) @ pool_matrix(H)     # (H, H)
    Mw = bilinear_matrix(W, W // 2) @ pool_matrix(W)     # (W, W)

    tb = _choose_tb(B, HW)
    grid = (pl.cdiv(B, tb),)         # no padding: partial last block is masked by Pallas
    x2d = x_nchw.reshape(B, HW)      # metadata-only reshape (no HBM copy)

    compiler_params = pltpu.CompilerParams(
        dimension_semantics=("parallel",),
        vmem_limit_bytes=_VMEM_LIMIT,
    )

    if HW * HW * mat_itemsize <= _MAX_K_BYTES:
        # ---- Kronecker path: one lane-dense matmul per block ------------------
        # up_flat = x_flat @ K  with  K[p*W+q, i*W+j] = Mh[i,p] * Mw[j,q]
        K = jnp.asarray(np.kron(Mh, Mw).T, dtype=mat_dtype)         # (HW, HW)
        kernel = functools.partial(_updown_kron_kernel, alpha=float(alpha))
        cost = pl.CostEstimate(
            flops=2 * B * HW * HW,
            transcendentals=0,
            bytes_accessed=2 * B * HW * itemsize + HW * HW * mat_itemsize,
        )
        out2d = pl.pallas_call(
            kernel,
            out_shape=jax.ShapeDtypeStruct((B, HW), dtype),
            grid=grid,
            in_specs=[
                pl.BlockSpec((tb, HW), lambda b: (b, 0)),
                pl.BlockSpec((HW, HW), lambda b: (0, 0),
                             pipeline_mode=pl.Buffered(1)),   # grid-constant weight
            ],
            out_specs=pl.BlockSpec((tb, HW), lambda b: (b, 0)),
            compiler_params=compiler_params,
            cost_estimate=cost,
        )(x2d, K)
        return out2d.reshape(N, C, H, W)

    # ---- Separable fallback for large H*W ------------------------------------
    # TODO(synk): for very large H*W (e.g. 512^2 f32) add a second grid axis tiling H
    # (banded halo) or replace the dense Mh/Mw matmuls with a VPU stencil (<=3 nonzeros
    # per row) to stay HBM-bound and inside v7x's 64 MiB VMEM.
    MhT = jnp.asarray(Mh.T, dtype=mat_dtype)             # (H, H)
    MwT = jnp.asarray(Mw.T, dtype=mat_dtype)             # (W, W)
    kernel = functools.partial(_updown_sep_kernel, alpha=float(alpha), h=H, w=W)
    cost = pl.CostEstimate(
        flops=2 * B * HW * (H + W),
        transcendentals=0,
        bytes_accessed=2 * B * HW * itemsize + (H * H + W * W) * mat_itemsize,
    )
    out2d = pl.pallas_call(
        kernel,
        out_shape=jax.ShapeDtypeStruct((B, HW), dtype),
        grid=grid,
        in_specs=[
            pl.BlockSpec((tb, HW), lambda b: (b, 0)),
            pl.BlockSpec((H, H), lambda b: (0, 0), pipeline_mode=pl.Buffered(1)),
            pl.BlockSpec((W, W), lambda b: (0, 0), pipeline_mode=pl.Buffered(1)),
        ],
        out_specs=pl.BlockSpec((tb, HW), lambda b: (b, 0)),
        compiler_params=compiler_params,
        cost_estimate=cost,
    )(x2d, MhT, MwT)
    return out2d.reshape(N, C, H, W)


# ---------------------------------------------------------------------------
# Pure numpy reference (AvgPool2d(2) + bilinear align_corners=True + PReLU).
# ---------------------------------------------------------------------------
def ref_forward(x: np.ndarray, alpha: float = 0.25) -> np.ndarray:
    N, C, H, W = x.shape
    x1 = x.reshape(N, C, H // 2, 2, W // 2, 2).mean(axis=(3, 5))   # AvgPool2d(2)
    Ah = bilinear_matrix(H, H // 2)
    Aw = bilinear_matrix(W, W // 2)
    up = np.einsum("ip,ncpq,jq->ncij", Ah, x1, Aw)                 # bilinear, align_corners
    high = x - up
    return np.where(high >= 0, high, alpha * high)                 # PReLU(0.25)


if __name__ == "__main__":
    key = jax.random.PRNGKey(0)
    N, C, H, W = 2, 4, 16, 16
    x = jax.random.normal(key, (N, C, H, W), dtype=jnp.float32)

    # f32 path (f32 MXU matmul keeps the residual accurate).
    out = jax.block_until_ready(updownblock_forward(x))
    expected = ref_forward(np.asarray(x))
    np.testing.assert_allclose(np.asarray(out), expected, rtol=1e-4, atol=1e-4)

    # bf16 path (bf16 MXU operands, f32 accumulation).
    x_bf = x.astype(jnp.bfloat16)
    out_bf = jax.block_until_ready(updownblock_forward(x_bf))
    expected_bf = ref_forward(np.asarray(x_bf.astype(jnp.float32)))
    np.testing.assert_allclose(np.asarray(out_bf.astype(jnp.float32)), expected_bf,
                               rtol=0.05, atol=0.1)

    print("KERNEL_OK")
</pallas_src>

<mosaic_0001>
module attributes {stable_mosaic.version = 11 : i64} {
  func.func @_updown_kron_kernel(%arg0: i32, %arg1: memref<8x256xf32, #tpu.memory_space<vmem>>, %arg2: memref<256x256xf32, #tpu.memory_space<vmem>>, %arg3: memref<8x256xf32, #tpu.memory_space<vmem>>) attributes {dimension_semantics = [#tpu.dimension_semantics<parallel>], iteration_bounds = array<i64: 1>, scalar_prefetch = 0 : i64, scratch_operands = 0 : i64, tpu.core_type = #tpu.core_type<tc>, window_params = [{transform_indices = @transform_0, window_bounds = array<i64: 8, 256>}, {pipeline_mode = #tpu.pipeline_mode<synchronous>, transform_indices = @transform_1, window_bounds = array<i64: 256, 256>}, {transform_indices = @transform_2, window_bounds = array<i64: 8, 256>}]} {
    %c0 = arith.constant 0 : index
    %c0_0 = arith.constant 0 : index
    %0 = vector.load %arg1[%c0, %c0_0] : memref<8x256xf32, #tpu.memory_space<vmem>>, vector<8x256xf32>
    %c0_1 = arith.constant 0 : index
    %c0_2 = arith.constant 0 : index
    %1 = vector.load %arg2[%c0_1, %c0_2] : memref<256x256xf32, #tpu.memory_space<vmem>>, vector<256x256xf32>
    %cst = arith.constant dense<0.000000e+00> : vector<8x256xf32>
    %2 = tpu.matmul %0, %1, %cst {dimension_numbers = #tpu.dot_dimension_numbers<[1], [0], [0], [1], [0, 0, 1, 1], [], []>} : vector<8x256xf32>, vector<256x256xf32>, vector<8x256xf32> -> vector<8x256xf32>
    %3 = arith.subf %0, %2 : vector<8x256xf32>
    %cst_3 = arith.constant 0.000000e+00 : f32
    %4 = vector.broadcast %cst_3 : f32 to vector<8x256xf32>
    %5 = arith.cmpf oge, %3, %4 : vector<8x256xf32>
    %cst_4 = arith.constant 2.500000e-01 : f32
    %6 = vector.broadcast %cst_4 : f32 to vector<8x256xf32>
    %7 = arith.mulf %6, %3 : vector<8x256xf32>
    %8 = arith.select %5, %3, %7 : vector<8x256xi1>, vector<8x256xf32>
    %c0_5 = arith.constant 0 : index
    %c0_6 = arith.constant 0 : index
    %9 = vector.load %arg3[%c0_5, %c0_6] : memref<8x256xf32, #tpu.memory_space<vmem>>, vector<8x256xf32>
    tpu.vector_store %arg3[%c0_5, %c0_6], %8 {strides = array<i32>} : memref<8x256xf32, #tpu.memory_space<vmem>>, vector<8x256xf32>,
    return
  }
  func.func @transform_0(%arg0: i32) -> (i32, i32) {
    %c0_i32 = arith.constant 0 : i32
    %c0_i32_0 = arith.constant 0 : i32
    return %arg0, %c0_i32 : i32, i32
  }
  func.func @transform_1(%arg0: i32) -> (i32, i32) {
    %c0_i32 = arith.constant 0 : i32
    %c0_i32_0 = arith.constant 0 : i32
    %c0_i32_1 = arith.constant 0 : i32
    return %c0_i32, %c0_i32_0 : i32, i32
  }
  func.func @transform_2(%arg0: i32) -> (i32, i32) {
    %c0_i32 = arith.constant 0 : i32
    %c0_i32_0 = arith.constant 0 : i32
    return %arg0, %c0_i32 : i32, i32
  }
}

</mosaic_0001>

<llo_original>
// kernel: tpu_custom_call.1
$region0: #{tpu_custom_call.1}
  #allocation0 [shape = 'u32[]', space=smem, size = 0x4, offset = 0x4, fixed_abs, tag = 'smem constant byte address 0x4 - core index']
  #allocation1 [shape = 'u32[144,128]{1,0:T(1,128)}', space=vmem, size = 0x12000, scoped, tag = 'internal scratch']
  %s0 = inlined_call_operand.hbm [shape: f32[8,256], index: 0, kind: input, shape index: {}]
  %s1 = inlined_call_operand.hbm [shape: f32[256,256], index: 1, kind: input, shape index: {}]
  %s2 = inlined_call_operand.hbm [shape: f32[8,256], index: 2, kind: output, shape index: {}]
  %s3 = sld [smem:[#allocation0]]
  $region26: #{tpu_custom_call.1} parent=0
    _
  %s5 = ssub.s32 1, %s3
  %s6 = scalar_select 0, %s5, %s3
  $region1: #{tpu_custom_call.1} parent=0
    #allocation2 [shape = 'u8[8192]{0}', space=vmem, size = 0x2000, scoped, tag = 'input window, operand 0, single buffered']
    #allocation3 [shape = 's32[1]{0}', space=sflag, size = 0x4, scoped, tag = 'scoped memory for tpu_custom_call.1']
    #allocation4 [shape = 's32[1]{0}', space=sflag, size = 0x4, scoped, tag = 'scoped memory for tpu_custom_call.1']
    #allocation5 [shape = 'u8[262144]{0}', space=vmem, size = 0x40000, scoped, tag = 'input window, operand 1, single buffered']
    #allocation6 [shape = 's32[1]{0}', space=sflag, size = 0x4, scoped, tag = 'scoped memory for tpu_custom_call.1']
    #allocation7 [shape = 'u8[8192]{0}', space=vmem, size = 0x2000, scoped, tag = 'output window, operand 0, single buffered']
    %7 = vsyncpa [#allocation3], 0
    %8 = vsyncpa [#allocation6], 0
    %9 = vsyncpa [#allocation4], 0
    // Predicated region
    $region2: #{tpu_custom_call.1} parent=1 // pred_check
      _
    $region3: #{tpu_custom_call.1} parent=1 // pred_check_branch
      %11 = sbr.rel (0) target = $region5
    $region4: #{tpu_custom_call.1} parent=1 // pred_region
      %s13 = ssub.s32 256, 256
      %14 = vsyncadd [#allocation3], %s13
      %s16 = sshll.u32 [#allocation2], 4
      %s17 = int_to_ptr.vmem [resolvable:$true] %s16
      %19 = dma.hbm_to_vmem [thread:$0]  %s0, 256, %s17, [#allocation3]
    $region5: #{tpu_custom_call.1} parent=1 // pred_fallthru
      _
    // Predicated region
    $region6: #{tpu_custom_call.1} parent=1 // pred_check
      _
    $region7: #{tpu_custom_call.1} parent=1 // pred_check_branch
      %21 = sbr.rel (0) target = $region9
    $region8: #{tpu_custom_call.1} parent=1 // pred_region
      %s23 = ssub.s32 8192, 8192
      %24 = vsyncadd [#allocation6], %s23
      %s25 = sshll.u32 [#allocation5], 4
      %s26 = int_to_ptr.vmem [resolvable:$true] %s25
      %31 = dma.hbm_to_vmem [thread:$0]  %s1, 8192, %s26, [#allocation6], 256, 256, 16
    $region9: #{tpu_custom_call.1} parent=1 // pred_fallthru
      _
    // Predicated region
    $region10: #{tpu_custom_call.1} parent=1 // pred_check
      _
    $region11: #{tpu_custom_call.1} parent=1 // pred_check_branch
      %33 = sbr.rel (0) target = $region13
    $region12: #{tpu_custom_call.1} parent=1 // pred_region
      %34 = dma.done [#allocation3], 256
    $region13: #{tpu_custom_call.1} parent=1 // pred_fallthru
      _
    // Predicated region
    $region14: #{tpu_custom_call.1} parent=1 // pred_check
      _
    $region15: #{tpu_custom_call.1} parent=1 // pred_check_branch
      %36 = sbr.rel (0) target = $region17
    $region16: #{tpu_custom_call.1} parent=1 // pred_region
      %37 = dma.done [#allocation6], 8192
    $region17: #{tpu_custom_call.1} parent=1 // pred_fallthru
      _
    %v38 = vld [vmem:[#allocation2] sm:$0xff]
    %v39 = vld [vmem:[#allocation2 + $0x8] sm:$0xff]
    %v40 = vld [vmem:[#allocation5] sm:$0xff]
    %v41 = vld [vmem:[#allocation5 + $0x8] sm:$0xff]
    %v42 = vld [vmem:[#allocation5 + $0x10] sm:$0xff]
    %v43 = vld [vmem:[#allocation5 + $0x18] sm:$0xff]
    %v44 = vld [vmem:[#allocation5 + $0x20] sm:$0xff]
    %v45 = vld [vmem:[#allocation5 + $0x28] sm:$0xff]
    %v46 = vld [vmem:[#allocation5 + $0x30] sm:$0xff]
    %v47 = vld [vmem:[#allocation5 + $0x38] sm:$0xff]
    %v48 = vld [vmem:[#allocation5 + $0x40] sm:$0xff]
    %v49 = vld [vmem:[#allocation5 + $0x48] sm:$0xff]
    %v50 = vld [vmem:[#allocation5 + $0x50] sm:$0xff]
    %v51 = vld [vmem:[#allocation5 + $0x58] sm:$0xff]
    %v52 = vld [vmem:[#allocation5 + $0x60] sm:$0xff]
    %v53 = vld [vmem:[#allocation5 + $0x68] sm:$0xff]
    %v54 = vld [vmem:[#allocation5 + $0x70] sm:$0xff]
    %v55 = vld [vmem:[#allocation5 + $0x78] sm:$0xff]
    %v56 = vld [vmem:[#allocation5 + $0x80] sm:$0xff]
    %v57 = vld [vmem:[#allocation5 + $0x88] sm:$0xff]
    %v58 = vld [vmem:[#allocation5 + $0x90] sm:$0xff]
    %v59 = vld [vmem:[#allocation5 + $0x98] sm:$0xff]
    %v60 = vld [vmem:[#allocation5 + $0xa0] sm:$0xff]
    %v61 = vld [vmem:[#allocation5 + $0xa8] sm:$0xff]
    %v62 = vld [vmem:[#allocation5 + $0xb0] sm:$0xff]
    %v63 = vld [vmem:[#allocation5 + $0xb8] sm:$0xff]
    %v64 = vld [vmem:[#allocation5 + $0xc0] sm:$0xff]
    %v65 = vld [vmem:[#allocation5 + $0xc8] sm:$0xff]
    %v66 = vld [vmem:[#allocation5 + $0xd0] sm:$0xff]
    %v67 = vld [vmem:[#allocation5 + $0xd8] sm:$0xff]
    %v68 = vld [vmem:[#allocation5 + $0xe0] sm:$0xff]
    %v69 = vld [vmem:[#allocation5 + $0xe8] sm:$0xff]
    %v70 = vld [vmem:[#allocation5 + $0xf0] sm:$0xff]
    %v71 = vld [vmem:[#allocation5 + $0xf8] sm:$0xff]
    %v72 = vld [vmem:[#allocation5 + $0x100] sm:$0xff]
    %v73 = vld [vmem:[#allocation5 + $0x108] sm:$0xff]
    %v74 = vld [vmem:[#allocation5 + $0x110] sm:$0xff]
    %v75 = vld [vmem:[#allocation5 + $0x118] sm:$0xff]
    %v76 = vld [vmem:[#allocation5 + $0x120] sm:$0xff]
    %v77 = vld [vmem:[#allocation5 + $0x128] sm:$0xff]
    %v78 = vld [vmem:[#allocation5 + $0x130] sm:$0xff]
    %v79 = vld [vmem:[#allocation5 + $0x138] sm:$0xff]
    %v80 = vld [vmem:[#allocation5 + $0x140] sm:$0xff]
    %v81 = vld [vmem:[#allocation5 + $0x148] sm:$0xff]
    %v82 = vld [vmem:[#allocation5 + $0x150] sm:$0xff]
    %v83 = vld [vmem:[#allocation5 + $0x158] sm:$0xff]
    %v84 = vld [vmem:[#allocation5 + $0x160] sm:$0xff]
    %v85 = vld [vmem:[#allocation5 + $0x168] sm:$0xff]
    %v86 = vld [vmem:[#allocation5 + $0x170] sm:$0xff]
    %v87 = vld [vmem:[#allocation5 + $0x178] sm:$0xff]
    %v88 = vld [vmem:[#allocation5 + $0x180] sm:$0xff]
    %v89 = vld [vmem:[#allocation5 + $0x188] sm:$0xff]
    %v90 = vld [vmem:[#allocation5 + $0x190] sm:$0xff]
    %v91 = vld [vmem:[#allocation5 + $0x198] sm:$0xff]
    %v92 = vld [vmem:[#allocation5 + $0x1a0] sm:$0xff]
    %v93 = vld [vmem:[#allocation5 + $0x1a8] sm:$0xff]
    %v94 = vld [vmem:[#allocation5 + $0x1b0] sm:$0xff]
    %v95 = vld [vmem:[#allocation5 + $0x1b8] sm:$0xff]
    %v96 = vld [vmem:[#allocation5 + $0x1c0] sm:$0xff]
    %v97 = vld [vmem:[#allocation5 + $0x1c8] sm:$0xff]
    %v98 = vld [vmem:[#allocation5 + $0x1d0] sm:$0xff]
    %v99 = vld [vmem:[#allocation5 + $0x1d8] sm:$0xff]
    %v100 = vld [vmem:[#allocation5 + $0x1e0] sm:$0xff]
    %v101 = vld [vmem:[#allocation5 + $0x1e8] sm:$0xff]
    %v102 = vld [vmem:[#allocation5 + $0x1f0] sm:$0xff]
    %v103 = vld [vmem:[#allocation5 + $0x1f8] sm:$0xff]
    %104 = vmatprep.subr.mxu0 %v41
    %105 = vmatpush1.msra.mxu0 %v40
    %106 = vmatprep.subr.mxu0 %v43
    %107 = vmatpush1.msra.mxu0 %v42
    %108 = vmatprep.subr.mxu0 %v45
    %109 = vmatpush1.msra.mxu0 %v44
    %110 = vmatprep.subr.mxu0 %v47
    %111 = vmatpush1.msra.mxu0 %v46
    %112 = vmatprep.subr.mxu0 %v49
    %113 = vmatpush1.msra.mxu0 %v48
    %114 = vmatprep.subr.mxu0 %v51
    %115 = vmatpush1.msra.mxu0 %v50
    %116 = vmatprep.subr.mxu0 %v53
    %117 = vmatpush1.msra.mxu0 %v52
    %118 = vmatprep.subr.mxu0 %v55
    %119 = vmatpush1.msra.mxu0 %v54
    %120 = vmatprep.subr.mxu0 %v57
    %121 = vmatpush1.msra.mxu0 %v56
    %122 = vmatprep.subr.mxu0 %v59
    %123 = vmatpush1.msra.mxu0 %v58
    %124 = vmatprep.subr.mxu0 %v61
    %125 = vmatpush1.msra.mxu0 %v60
    %126 = vmatprep.subr.mxu0 %v63
    %127 = vmatpush1.msra.mxu0 %v62
    %128 = vmatprep.subr.mxu0 %v65
    %129 = vmatpush1.msra.mxu0 %v64
    %130 = vmatprep.subr.mxu0 %v67
    %131 = vmatpush1.msra.mxu0 %v66
    %132 = vmatprep.subr.mxu0 %v69
    %133 = vmatpush1.msra.mxu0 %v68
    %134 = vmatprep.subr.mxu0 %v71
    %135 = vmatpush1.msra.mxu0 %v70
    %136 = vmatprep.subr.mxu0 %v73
    %137 = vmatpush1.msra.mxu0 %v72
    %138 = vmatprep.subr.mxu0 %v75
    %139 = vmatpush1.msra.mxu0 %v74
    %140 = vmatprep.subr.mxu0 %v77
    %141 = vmatpush1.msra.mxu0 %v76
    %142 = vmatprep.subr.mxu0 %v79
    %143 = vmatpush1.msra.mxu0 %v78
    %144 = vmatprep.subr.mxu0 %v81
    %145 = vmatpush1.msra.mxu0 %v80
    %146 = vmatprep.subr.mxu0 %v83
    %147 = vmatpush1.msra.mxu0 %v82
    %148 = vmatprep.subr.mxu0 %v85
    %149 = vmatpush1.msra.mxu0 %v84
    %150 = vmatprep.subr.mxu0 %v87
    %151 = vmatpush1.msra.mxu0 %v86
    %152 = vmatprep.subr.mxu0 %v89
    %153 = vmatpush1.msra.mxu0 %v88
    %154 = vmatprep.subr.mxu0 %v91
    %155 = vmatpush1.msra.mxu0 %v90
    %156 = vmatprep.subr.mxu0 %v93
    %157 = vmatpush1.msra.mxu0 %v92
    %158 = vmatprep.subr.mxu0 %v95
    %159 = vmatpush1.msra.mxu0 %v94
    %160 = vmatprep.subr.mxu0 %v97
    %161 = vmatpush1.msra.mxu0 %v96
    %162 = vmatprep.subr.mxu0 %v99
    %163 = vmatpush1.msra.mxu0 %v98
    %164 = vmatprep.subr.mxu0 %v101
    %165 = vmatpush1.msra.mxu0 %v100
    %166 = vmatprep.subr.mxu0 %v103
    %167 = vmatpush1.msra.mxu0 %v102
    %168 = vmatprep.mubr.f32.mxu0 %v39
    %169 = vmatmul.mubr.f32.gmra.mrb[0].mxu0 %v38
    %v170 = vpop.f32.mrb[0].mxu0
    %v171 = vadd.f32 0.0, %v170
    %v172 = vpop.f32.mrb[0].mxu0
    %v173 = vadd.f32 0.0, %v172
    %174 = vdwg.mxu0
    %v175 = vsub.f32 %v38, %v171
    %v176 = vsub.f32 %v39, %v173
    %vm177 = vcmp.ge.f32.partialorder %v175, 0.0
    %vm178 = vcmp.ge.f32.partialorder %v176, 0.0
    %v179 = vmul.f32 %v175, 0.25
    %v180 = vmul.f32 %v176, 0.25
    %v181 = vsel %vm177, %v175, %v179
    %v182 = vsel %vm178, %v176, %v180
    %183 = vst [vmem:[#allocation7] sm:$0xff] %v181
    %184 = vst [vmem:[#allocation7 + $0x8] sm:$0xff] %v182
    // Predicated region
    $region18: #{tpu_custom_call.1} parent=1 // pred_check
      _
    $region19: #{tpu_custom_call.1} parent=1 // pred_check_branch
      %186 = sbr.rel (0) target = $region21
    $region20: #{tpu_custom_call.1} parent=1 // pred_region
      %s188 = ssub.s32 256, 256
      %189 = vsyncadd [#allocation4], %s188
      %s191 = sshll.u32 [#allocation7], 4
      %s192 = int_to_ptr.vmem [resolvable:$true] %s191
      %194 = dma.vmem_to_hbm [thread:$0]  %s192, 256, %s2, [#allocation4]
    $region21: #{tpu_custom_call.1} parent=1 // pred_fallthru
      _
    // Predicated region
    $region22: #{tpu_custom_call.1} parent=1 // pred_check
      _
    $region23: #{tpu_custom_call.1} parent=1 // pred_check_branch
      %196 = sbr.rel (0) target = $region25
    $region24: #{tpu_custom_call.1} parent=1 // pred_region
      %197 = dma.done [#allocation4], 256
    $region25: #{tpu_custom_call.1} parent=1 // pred_fallthru
      _
    %198 = vsyncpa [#allocation3], 1
    %199 = vsyncpa [#allocation6], 1
    %200 = vsyncpa [#allocation4], 1

</llo_original>
